<compile_context>
chip_gen: v6e
topology: v6e:2x2x1
jax: 0.10.0
libtpu: 0.0.40
codegen_flags: <defaults>
</compile_context>

<pallas_src>
import functools

import jax
import jax.numpy as jnp
from jax import lax
from jax.experimental import pallas as pl
from jax.experimental.pallas import tpu as pltpu

TM_MAX = 512   # max output-pixel rows per grid step
TN = 128       # output-channel (lane) tile
TK = 128       # contraction (IC*KH*KW) tile

_VMEM_LIMIT = 32 * 1024 * 1024  # explicit scoped-VMEM budget, safe on v5e/v6e/v7x


def _round_up(x, m):
    return ((x + m - 1) // m) * m


def _conv_stats_kernel(p_ref, w_ref, y_ref, stats_ref):
    # p_ref: (TM, TK) bf16   w_ref: (TK, TN) bf16
    # y_ref: (TM, TN) f32   -- resident over the K axis; doubles as the f32 accumulator
    # stats_ref: (1, 2, TN) f32 -- per-(M-tile, OC-tile) partial [sum ; sum-of-squares]
    k = pl.program_id(2)

    @pl.when(k == 0)
    def _():
        y_ref[...] = jnp.zeros_like(y_ref)

    y_ref[...] += jnp.dot(p_ref[...], w_ref[...],
                          preferred_element_type=jnp.float32)

    @pl.when(k == pl.num_programs(2) - 1)
    def _():
        y = y_ref[...]
        stats_ref[0, 0:1, :] = jnp.sum(y, axis=0, keepdims=True)
        stats_ref[0, 1:2, :] = jnp.sum(y * y, axis=0, keepdims=True)


def _bn_relu_kernel(y_ref, scale_ref, shift_ref, o_ref, *, relu):
    out = y_ref[...] * scale_ref[...] + shift_ref[...]
    if relu:
        out = jnp.maximum(out, 0.0)
    o_ref[...] = out


def conv_br2d(x, weight, gamma, beta, *, stride=1, padding=0, dilation=1, groups=1,
              is_activation=True, eps=1e-5):
    assert dilation == 1 and groups == 1  # TODO(synk): dilation/groups > 1 not implemented
    N, C, H, W = x.shape
    OC, IC, KH, KW = weight.shape
    assert IC == C
    OH = (H + 2 * padding - KH) // stride + 1
    OW = (W + 2 * padding - KW) // stride + 1

    # --- glue: zero-pad + im2col patch extraction in bf16 (pure data rearrangement) ---
    xp = jnp.pad(x, ((0, 0), (0, 0), (padding, padding), (padding, padding)))
    xp = xp.astype(jnp.bfloat16)
    cols = []
    for kh in range(KH):
        for kw in range(KW):
            cols.append(xp[:, :, kh:kh + stride * OH:stride, kw:kw + stride * OW:stride])
    patches = jnp.stack(cols, axis=2)                       # (N, C, KH*KW, OH, OW)
    patches = patches.reshape(N, C * KH * KW, OH, OW)
    patches = patches.transpose(0, 2, 3, 1).reshape(N * OH * OW, C * KH * KW)

    M, K = patches.shape
    tm = min(TM_MAX, _round_up(M, 8))                       # adapt row tile to problem size
    M_pad = _round_up(M, tm)
    K_pad = _round_up(K, TK)
    OC_pad = _round_up(OC, TN)

    # zero rows / zero K columns contribute nothing to the dot product or the stats
    patches = jnp.pad(patches, ((0, M_pad - M), (0, K_pad - K)))
    w2 = weight.reshape(OC, K).T.astype(jnp.bfloat16)       # (K, OC)
    w2 = jnp.pad(w2, ((0, K_pad - K), (0, OC_pad - OC)))

    gm, gn, gk = M_pad // tm, OC_pad // TN, K_pad // TK

    # --- kernel 1: conv matmul (bf16 MXU, f32 accumulate) + per-tile batch-stat partials ---
    y, stats = pl.pallas_call(
        _conv_stats_kernel,
        out_shape=(jax.ShapeDtypeStruct((M_pad, OC_pad), jnp.float32),
                   jax.ShapeDtypeStruct((gm, 2, OC_pad), jnp.float32)),
        grid_spec=pltpu.PrefetchScalarGridSpec(
            num_scalar_prefetch=0,
            grid=(gm, gn, gk),
            in_specs=[pl.BlockSpec((tm, TK), lambda i, j, k: (i, k)),
                      pl.BlockSpec((TK, TN), lambda i, j, k: (k, j))],
            out_specs=(pl.BlockSpec((tm, TN), lambda i, j, k: (i, j)),
                       pl.BlockSpec((1, 2, TN), lambda i, j, k: (i, 0, j)))),
        compiler_params=pltpu.CompilerParams(
            dimension_semantics=("parallel", "parallel", "arbitrary"),
            vmem_limit_bytes=_VMEM_LIMIT),
    )(patches, w2)

    # --- glue: tiny per-channel scalar math (train-mode BN: biased variance) ---
    totals = jnp.sum(stats, axis=0)                         # (2, OC_pad)
    cnt = jnp.float32(M)                                    # true element count per channel
    mean = totals[0] / cnt
    # TODO(synk): for very large M use a shifted/Welford-style combine to avoid cancellation.
    var = jnp.maximum(totals[1] / cnt - mean * mean, 0.0)
    inv_std = lax.rsqrt(var + eps)
    g = jnp.pad(gamma.astype(jnp.float32), (0, OC_pad - OC))
    b = jnp.pad(beta.astype(jnp.float32), (0, OC_pad - OC))
    scale = (g * inv_std).reshape(1, OC_pad)
    shift = (b - mean * g * inv_std).reshape(1, OC_pad)

    # --- kernel 2: fused BN affine + ReLU, in-place on the conv output ---
    out = pl.pallas_call(
        functools.partial(_bn_relu_kernel, relu=is_activation),
        out_shape=jax.ShapeDtypeStruct((M_pad, OC_pad), jnp.float32),
        grid_spec=pltpu.PrefetchScalarGridSpec(
            num_scalar_prefetch=0,
            grid=(gm, gn),
            in_specs=[pl.BlockSpec((tm, TN), lambda i, j: (i, j)),
                      pl.BlockSpec((1, TN), lambda i, j: (0, j)),
                      pl.BlockSpec((1, TN), lambda i, j: (0, j))],
            out_specs=pl.BlockSpec((tm, TN), lambda i, j: (i, j))),
        input_output_aliases={0: 0},
        compiler_params=pltpu.CompilerParams(
            dimension_semantics=("parallel", "parallel"),
            vmem_limit_bytes=_VMEM_LIMIT),
    )(y, scale, shift)

    # back to NCHW (see header TODO about folding this transpose into kernel 2)
    return out[:M, :OC].reshape(N, OH, OW, OC).transpose(0, 3, 1, 2)


def _reference(x, weight, gamma, beta, *, stride, padding, is_activation, eps=1e-5):
    y = lax.conv_general_dilated(
        x, weight, window_strides=(stride, stride),
        padding=[(padding, padding), (padding, padding)],
        dimension_numbers=("NCHW", "OIHW", "NCHW"),
        precision=lax.Precision.HIGHEST)
    m = y.mean(axis=(0, 2, 3), keepdims=True)
    v = y.var(axis=(0, 2, 3), keepdims=True)
    out = (y - m) / jnp.sqrt(v + eps) * gamma.reshape(1, -1, 1, 1) + beta.reshape(1, -1, 1, 1)
    if is_activation:
        out = jnp.maximum(out, 0.0)
    return out


if __name__ == "__main__":
    # ConvBR2d(in_channels=4, out_channels=8, kernel_size=3, padding=1)
    N, C, H, W = 2, 4, 16, 16
    OC, KH, KW = 8, 3, 3
    stride, padding = 1, 1

    key = jax.random.PRNGKey(0)
    kx, kw = jax.random.split(key)
    x = jax.random.normal(kx, (N, C, H, W), dtype=jnp.float32)
    weight = jax.random.normal(kw, (OC, C, KH, KW), dtype=jnp.float32) * 0.1
    gamma = jnp.ones((OC,), dtype=jnp.float32)   # BatchNorm2d default init
    beta = jnp.zeros((OC,), dtype=jnp.float32)

    out = conv_br2d(x, weight, gamma, beta, stride=stride, padding=padding,
                    is_activation=True)
    out = jax.block_until_ready(out)
    assert out.shape == (N, OC, H, W), out.shape

    # apples-to-apples check: reference driven by the same bf16-rounded operands (tight tol)
    ref_bf16_inputs = _reference(
        x.astype(jnp.bfloat16).astype(jnp.float32),
        weight.astype(jnp.bfloat16).astype(jnp.float32),
        gamma, beta, stride=stride, padding=padding, is_activation=True)
    assert jnp.allclose(out, ref_bf16_inputs, atol=2e-3, rtol=2e-3), \
        float(jnp.max(jnp.abs(out - ref_bf16_inputs)))

    # sanity check vs full-f32 reference (bf16-MXU-level tolerance)
    ref = _reference(x, weight, gamma, beta, stride=stride, padding=padding,
                     is_activation=True)
    assert jnp.allclose(out, ref, atol=5e-2, rtol=5e-2), \
        float(jnp.max(jnp.abs(out - ref)))

    print("KERNEL_OK")
</pallas_src>

<mosaic_0001>
module attributes {stable_mosaic.version = 11 : i64} {
  func.func @_conv_stats_kernel(%arg0: i32, %arg1: i32, %arg2: i32, %arg3: memref<512x128xbf16, #tpu.memory_space<vmem>>, %arg4: memref<128x128xbf16, #tpu.memory_space<vmem>>, %arg5: memref<512x128xf32, #tpu.memory_space<vmem>>, %arg6: memref<1x2x128xf32, #tpu.memory_space<vmem>>) attributes {dimension_semantics = [#tpu.dimension_semantics<parallel>, #tpu.dimension_semantics<parallel>, #tpu.dimension_semantics<arbitrary>], iteration_bounds = array<i64: 1, 1, 1>, scalar_prefetch = 0 : i64, scratch_operands = 0 : i64, tpu.core_type = #tpu.core_type<tc>, window_params = [{transform_indices = @transform_0, window_bounds = array<i64: 512, 128>}, {transform_indices = @transform_1, window_bounds = array<i64: 128, 128>}, {transform_indices = @transform_2, window_bounds = array<i64: 512, 128>}, {transform_indices = @transform_3, window_bounds = array<i64: 1, 2, 128>}]} {
    %c0_i32 = arith.constant 0 : i32
    %0 = arith.cmpi eq, %arg2, %c0_i32 : i32
    %1 = arith.extui %0 : i1 to i32
    %c0_i32_0 = arith.constant 0 : i32
    %2 = arith.cmpi ne, %1, %c0_i32_0 : i32
    scf.if %2 {
      %cst_10 = arith.constant 0.000000e+00 : f32
      %12 = vector.broadcast %cst_10 : f32 to vector<512x128xf32>
      %c0_11 = arith.constant 0 : index
      %c0_12 = arith.constant 0 : index
      %13 = vector.load %arg5[%c0_11, %c0_12] : memref<512x128xf32, #tpu.memory_space<vmem>>, vector<512x128xf32>
      tpu.vector_store %arg5[%c0_11, %c0_12], %12 {strides = array<i32>} : memref<512x128xf32, #tpu.memory_space<vmem>>, vector<512x128xf32>,
    } else {
    }
    %c0 = arith.constant 0 : index
    %c0_1 = arith.constant 0 : index
    %3 = vector.load %arg5[%c0, %c0_1] : memref<512x128xf32, #tpu.memory_space<vmem>>, vector<512x128xf32>
    %c0_2 = arith.constant 0 : index
    %c0_3 = arith.constant 0 : index
    %4 = vector.load %arg3[%c0_2, %c0_3] : memref<512x128xbf16, #tpu.memory_space<vmem>>, vector<512x128xbf16>
    %c0_4 = arith.constant 0 : index
    %c0_5 = arith.constant 0 : index
    %5 = vector.load %arg4[%c0_4, %c0_5] : memref<128x128xbf16, #tpu.memory_space<vmem>>, vector<128x128xbf16>
    %cst = arith.constant dense<0.000000e+00> : vector<512x128xf32>
    %6 = tpu.matmul %4, %5, %cst {dimension_numbers = #tpu.dot_dimension_numbers<[1], [0], [0], [1], [0, 0, 1, 1], [], []>} : vector<512x128xbf16>, vector<128x128xbf16>, vector<512x128xf32> -> vector<512x128xf32>
    %7 = arith.addf %3, %6 : vector<512x128xf32>
    %c0_6 = arith.constant 0 : index
    %c0_7 = arith.constant 0 : index
    %8 = vector.load %arg5[%c0_6, %c0_7] : memref<512x128xf32, #tpu.memory_space<vmem>>, vector<512x128xf32>
    tpu.vector_store %arg5[%c0_6, %c0_7], %7 {strides = array<i32>} : memref<512x128xf32, #tpu.memory_space<vmem>>, vector<512x128xf32>,
    %c0_i32_8 = arith.constant 0 : i32
    %9 = arith.cmpi eq, %arg2, %c0_i32_8 : i32
    %10 = arith.extui %9 : i1 to i32
    %c0_i32_9 = arith.constant 0 : i32
    %11 = arith.cmpi ne, %10, %c0_i32_9 : i32
    scf.if %11 {
      %c0_10 = arith.constant 0 : index
      %c0_11 = arith.constant 0 : index
      %12 = vector.load %arg5[%c0_10, %c0_11] : memref<512x128xf32, #tpu.memory_space<vmem>>, vector<512x128xf32>
      %cst_12 = arith.constant dense<0.000000e+00> : vector<128xf32>
      %13 = vector.multi_reduction <add>, %12, %cst_12 [0] : vector<512x128xf32> to vector<128xf32>
      %14 = vector.shape_cast %13 : vector<128xf32> to vector<1x128xf32>
      %c0_13 = arith.constant 0 : index
      %c0_14 = arith.constant 0 : index
      %c0_15 = arith.constant 0 : index
      %15 = vector.load %arg6[%c0_13, %c0_14, %c0_15] : memref<1x2x128xf32, #tpu.memory_space<vmem>>, vector<1x1x128xf32>
      %16 = vector.shape_cast %15 : vector<1x1x128xf32> to vector<1x128xf32>
      %17 = vector.shape_cast %14 : vector<1x128xf32> to vector<1x1x128xf32>
      tpu.vector_store %arg6[%c0_13, %c0_14, %c0_15], %17 {strides = array<i32>} : memref<1x2x128xf32, #tpu.memory_space<vmem>>, vector<1x1x128xf32>,
      %18 = arith.mulf %12, %12 : vector<512x128xf32>
      %cst_16 = arith.constant dense<0.000000e+00> : vector<128xf32>
      %19 = vector.multi_reduction <add>, %18, %cst_16 [0] : vector<512x128xf32> to vector<128xf32>
      %20 = vector.shape_cast %19 : vector<128xf32> to vector<1x128xf32>
      %c0_17 = arith.constant 0 : index
      %c1 = arith.constant 1 : index
      %c0_18 = arith.constant 0 : index
      %21 = vector.load %arg6[%c0_17, %c1, %c0_18] : memref<1x2x128xf32, #tpu.memory_space<vmem>>, vector<1x1x128xf32>
      %22 = vector.shape_cast %21 : vector<1x1x128xf32> to vector<1x128xf32>
      %23 = vector.shape_cast %20 : vector<1x128xf32> to vector<1x1x128xf32>
      tpu.vector_store %arg6[%c0_17, %c1, %c0_18], %23 {strides = array<i32>} : memref<1x2x128xf32, #tpu.memory_space<vmem>>, vector<1x1x128xf32>,
    } else {
    }
    return
  }
  func.func @transform_0(%arg0: i32, %arg1: i32, %arg2: i32) -> (i32, i32) {
    %c0_i32 = arith.constant 0 : i32
    return %arg0, %arg2 : i32, i32
  }
  func.func @transform_1(%arg0: i32, %arg1: i32, %arg2: i32) -> (i32, i32) {
    %c0_i32 = arith.constant 0 : i32
    return %arg2, %arg1 : i32, i32
  }
  func.func @transform_2(%arg0: i32, %arg1: i32, %arg2: i32) -> (i32, i32) {
    %c0_i32 = arith.constant 0 : i32
    return %arg0, %arg1 : i32, i32
  }
  func.func @transform_3(%arg0: i32, %arg1: i32, %arg2: i32) -> (i32, i32, i32) {
    %c0_i32 = arith.constant 0 : i32
    %c0_i32_0 = arith.constant 0 : i32
    return %arg0, %c0_i32, %arg1 : i32, i32, i32
  }
}

</mosaic_0001>

<llo_original>
// kernel: tpu_custom_call.1
$region0: #{tpu_custom_call.1}
  #allocation0 [shape = 'u32[]', space=smem, size = 0x4, offset = 0x4, fixed_abs, tag = 'smem constant byte address 0x4 - core index']
  #allocation1 [shape = 'u32[144,128]{1,0:T(1,128)}', space=vmem, size = 0x12000, scoped, tag = 'internal scratch']
  %s0 = inlined_call_operand.hbm [shape: bf16[512,128], index: 0, kind: input, shape index: {}]
  %s1 = inlined_call_operand.hbm [shape: bf16[128,128], index: 1, kind: input, shape index: {}]
  %s2 = inlined_call_operand.hbm [shape: f32[512,128], index: 2, kind: output, shape index: {0}]
  %s3 = inlined_call_operand.hbm [shape: f32[1,2,128], index: 3, kind: output, shape index: {1}]
  %4 = xla_tuple %s2, %s3
  %s5 = sld [smem:[#allocation0]]
  $region42: #{tpu_custom_call.1} parent=0
    _
  %s7 = ssub.s32 1, %s5
  %s8 = scalar_select 0, %s7, %s5
  $region1: #{tpu_custom_call.1} parent=0
    #allocation2 [shape = 'u8[131072]{0}', space=vmem, size = 0x20000, scoped, tag = 'input window, operand 0, single buffered']
    #allocation3 [shape = 's32[1]{0}', space=sflag, size = 0x4, scoped, tag = 'scoped memory for tpu_custom_call.1']
    #allocation4 [shape = 's32[1]{0}', space=sflag, size = 0x4, scoped, tag = 'scoped memory for tpu_custom_call.1']
    #allocation5 [shape = 'u8[32768]{0}', space=vmem, size = 0x8000, scoped, tag = 'input window, operand 1, single buffered']
    #allocation6 [shape = 's32[1]{0}', space=sflag, size = 0x4, scoped, tag = 'scoped memory for tpu_custom_call.1']
    #allocation7 [shape = 'u8[262144]{0}', space=vmem, size = 0x40000, scoped, tag = 'output window, operand 0, single buffered']
    #allocation8 [shape = 'u8[1024]{0}', space=vmem, size = 0x400, scoped, tag = 'output window, operand 1, single buffered']
    #allocation9 [shape = 's32[1]{0}', space=sflag, size = 0x4, scoped, tag = 'scoped memory for tpu_custom_call.1']
    %9 = vsyncpa [#allocation3], 0
    %10 = vsyncpa [#allocation6], 0
    %11 = vsyncpa [#allocation4], 0
    %12 = vsyncpa [#allocation9], 0
    // Predicated region
    $region2: #{tpu_custom_call.1} parent=1 // pred_check
      _
    $region3: #{tpu_custom_call.1} parent=1 // pred_check_branch
      %14 = sbr.rel (0) target = $region5
    $region4: #{tpu_custom_call.1} parent=1 // pred_region
      %s16 = ssub.s32 4096, 4096
      %17 = vsyncadd [#allocation3], %s16
      %s18 = sshll.u32 [#allocation2], 4
      %s19 = int_to_ptr.vmem [resolvable:$true] %s18
      %24 = dma.hbm_to_vmem [thread:$0]  %s0, 4096, %s19, [#allocation3], 64, 64, 4
    $region5: #{tpu_custom_call.1} parent=1 // pred_fallthru
      _
    // Predicated region
    $region6: #{tpu_custom_call.1} parent=1 // pred_check
      _
    $region7: #{tpu_custom_call.1} parent=1 // pred_check_branch
      %26 = sbr.rel (0) target = $region9
    $region8: #{tpu_custom_call.1} parent=1 // pred_region
      %s28 = ssub.s32 1024, 1024
      %29 = vsyncadd [#allocation6], %s28
      %s30 = sshll.u32 [#allocation5], 4
      %s31 = int_to_ptr.vmem [resolvable:$true] %s30
      %36 = dma.hbm_to_vmem [thread:$0]  %s1, 1024, %s31, [#allocation6], 64, 64, 4
    $region9: #{tpu_custom_call.1} parent=1 // pred_fallthru
      _
    // Predicated region
    $region10: #{tpu_custom_call.1} parent=1 // pred_check
      _
    $region11: #{tpu_custom_call.1} parent=1 // pred_check_branch
      %38 = sbr.rel (0) target = $region13
    $region12: #{tpu_custom_call.1} parent=1 // pred_region
      %39 = dma.done [#allocation3], 4096
    $region13: #{tpu_custom_call.1} parent=1 // pred_fallthru
      _
    // Predicated region
    $region14: #{tpu_custom_call.1} parent=1 // pred_check
      _
    $region15: #{tpu_custom_call.1} parent=1 // pred_check_branch
      %41 = sbr.rel (0) target = $region17
    $region16: #{tpu_custom_call.1} parent=1 // pred_region
      %42 = dma.done [#allocation6], 1024
    $region17: #{tpu_custom_call.1} parent=1 // pred_fallthru
      _
    %p44 = scmp.eq.s32.totalorder 0, 0
    // Predicated region
    $region18: #{tpu_custom_call.1} parent=1 // pred_check
      %p45 = pneg %p44
    $region19: #{tpu_custom_call.1} parent=1 // pred_check_branch
      %47 = sbr.rel (%p45) target = $region21
    $region20: #{tpu_custom_call.1} parent=1 // pred_region
      %48 = vst [vmem:[#allocation7] sm:$0xff] 0.0
      %49 = vst [vmem:[#allocation7 + $0x8] sm:$0xff] 0.0
      %50 = vst [vmem:[#allocation7 + $0x10] sm:$0xff] 0.0
      %51 = vst [vmem:[#allocation7 + $0x18] sm:$0xff] 0.0
      %52 = vst [vmem:[#allocation7 + $0x20] sm:$0xff] 0.0
      %53 = vst [vmem:[#allocation7 + $0x28] sm:$0xff] 0.0
      %54 = vst [vmem:[#allocation7 + $0x30] sm:$0xff] 0.0
      %55 = vst [vmem:[#allocation7 + $0x38] sm:$0xff] 0.0
      %56 = vst [vmem:[#allocation7 + $0x40] sm:$0xff] 0.0
      %57 = vst [vmem:[#allocation7 + $0x48] sm:$0xff] 0.0
      %58 = vst [vmem:[#allocation7 + $0x50] sm:$0xff] 0.0
      %59 = vst [vmem:[#allocation7 + $0x58] sm:$0xff] 0.0
      %60 = vst [vmem:[#allocation7 + $0x60] sm:$0xff] 0.0
      %61 = vst [vmem:[#allocation7 + $0x68] sm:$0xff] 0.0
      %62 = vst [vmem:[#allocation7 + $0x70] sm:$0xff] 0.0
      %63 = vst [vmem:[#allocation7 + $0x78] sm:$0xff] 0.0
      %64 = vst [vmem:[#allocation7 + $0x80] sm:$0xff] 0.0
      %65 = vst [vmem:[#allocation7 + $0x88] sm:$0xff] 0.0
      %66 = vst [vmem:[#allocation7 + $0x90] sm:$0xff] 0.0
      %67 = vst [vmem:[#allocation7 + $0x98] sm:$0xff] 0.0
      %68 = vst [vmem:[#allocation7 + $0xa0] sm:$0xff] 0.0
      %69 = vst [vmem:[#allocation7 + $0xa8] sm:$0xff] 0.0
      %70 = vst [vmem:[#allocation7 + $0xb0] sm:$0xff] 0.0
      %71 = vst [vmem:[#allocation7 + $0xb8] sm:$0xff] 0.0
      %72 = vst [vmem:[#allocation7 + $0xc0] sm:$0xff] 0.0
      %73 = vst [vmem:[#allocation7 + $0xc8] sm:$0xff] 0.0
      %74 = vst [vmem:[#allocation7 + $0xd0] sm:$0xff] 0.0
      %75 = vst [vmem:[#allocation7 + $0xd8] sm:$0xff] 0.0
      %76 = vst [vmem:[#allocation7 + $0xe0] sm:$0xff] 0.0
      %77 = vst [vmem:[#allocation7 + $0xe8] sm:$0xff] 0.0
      %78 = vst [vmem:[#allocation7 + $0xf0] sm:$0xff] 0.0
      %79 = vst [vmem:[#allocation7 + $0xf8] sm:$0xff] 0.0
      %80 = vst [vmem:[#allocation7 + $0x100] sm:$0xff] 0.0
      %81 = vst [vmem:[#allocation7 + $0x108] sm:$0xff] 0.0
      %82 = vst [vmem:[#allocation7 + $0x110] sm:$0xff] 0.0
      %83 = vst [vmem:[#allocation7 + $0x118] sm:$0xff] 0.0
      %84 = vst [vmem:[#allocation7 + $0x120] sm:$0xff] 0.0
      %85 = vst [vmem:[#allocation7 + $0x128] sm:$0xff] 0.0
      %86 = vst [vmem:[#allocation7 + $0x130] sm:$0xff] 0.0
      %87 = vst [vmem:[#allocation7 + $0x138] sm:$0xff] 0.0
      %88 = vst [vmem:[#allocation7 + $0x140] sm:$0xff] 0.0
      %89 = vst [vmem:[#allocation7 + $0x148] sm:$0xff] 0.0
      %90 = vst [vmem:[#allocation7 + $0x150] sm:$0xff] 0.0
      %91 = vst [vmem:[#allocation7 + $0x158] sm:$0xff] 0.0
      %92 = vst [vmem:[#allocation7 + $0x160] sm:$0xff] 0.0
      %93 = vst [vmem:[#allocation7 + $0x168] sm:$0xff] 0.0
      %94 = vst [vmem:[#allocation7 + $0x170] sm:$0xff] 0.0
      %95 = vst [vmem:[#allocation7 + $0x178] sm:$0xff] 0.0
      %96 = vst [vmem:[#allocation7 + $0x180] sm:$0xff] 0.0
      %97 = vst [vmem:[#allocation7 + $0x188] sm:$0xff] 0.0
      %98 = vst [vmem:[#allocation7 + $0x190] sm:$0xff] 0.0
      %99 = vst [vmem:[#allocation7 + $0x198] sm:$0xff] 0.0
      %100 = vst [vmem:[#allocation7 + $0x1a0] sm:$0xff] 0.0
      %101 = vst [vmem:[#allocation7 + $0x1a8] sm:$0xff] 0.0
      %102 = vst [vmem:[#allocation7 + $0x1b0] sm:$0xff] 0.0
      %103 = vst [vmem:[#allocation7 + $0x1b8] sm:$0xff] 0.0
      %104 = vst [vmem:[#allocation7 + $0x1c0] sm:$0xff] 0.0
      %105 = vst [vmem:[#allocation7 + $0x1c8] sm:$0xff] 0.0
      %106 = vst [vmem:[#allocation7 + $0x1d0] sm:$0xff] 0.0
      %107 = vst [vmem:[#allocation7 + $0x1d8] sm:$0xff] 0.0
      %108 = vst [vmem:[#allocation7 + $0x1e0] sm:$0xff] 0.0
      %109 = vst [vmem:[#allocation7 + $0x1e8] sm:$0xff] 0.0
      %110 = vst [vmem:[#allocation7 + $0x1f0] sm:$0xff] 0.0
      %111 = vst [vmem:[#allocation7 + $0x1f8] sm:$0xff] 0.0
    $region21: #{tpu_custom_call.1} parent=1 // pred_fallthru
      _
    %v112 = vld [vmem:[#allocation7] sm:$0xff]
    %v113 = vld [vmem:[#allocation7 + $0x8] sm:$0xff]
    %v114 = vld [vmem:[#allocation7 + $0x10] sm:$0xff]
    %v115 = vld [vmem:[#allocation7 + $0x18] sm:$0xff]
    %v116 = vld [vmem:[#allocation7 + $0x20] sm:$0xff]
    %v117 = vld [vmem:[#allocation7 + $0x28] sm:$0xff]
    %v118 = vld [vmem:[#allocation7 + $0x30] sm:$0xff]
    %v119 = vld [vmem:[#allocation7 + $0x38] sm:$0xff]
    %v120 = vld [vmem:[#allocation7 + $0x40] sm:$0xff]
    %v121 = vld [vmem:[#allocation7 + $0x48] sm:$0xff]
    %v122 = vld [vmem:[#allocation7 + $0x50] sm:$0xff]
    %v123 = vld [vmem:[#allocation7 + $0x58] sm:$0xff]
    %v124 = vld [vmem:[#allocation7 + $0x60] sm:$0xff]
    %v125 = vld [vmem:[#allocation7 + $0x68] sm:$0xff]
    %v126 = vld [vmem:[#allocation7 + $0x70] sm:$0xff]
    %v127 = vld [vmem:[#allocation7 + $0x78] sm:$0xff]
    %v128 = vld [vmem:[#allocation7 + $0x80] sm:$0xff]
    %v129 = vld [vmem:[#allocation7 + $0x88] sm:$0xff]
    %v130 = vld [vmem:[#allocation7 + $0x90] sm:$0xff]
    %v131 = vld [vmem:[#allocation7 + $0x98] sm:$0xff]
    %v132 = vld [vmem:[#allocation7 + $0xa0] sm:$0xff]
    %v133 = vld [vmem:[#allocation7 + $0xa8] sm:$0xff]
    %v134 = vld [vmem:[#allocation7 + $0xb0] sm:$0xff]
    %v135 = vld [vmem:[#allocation7 + $0xb8] sm:$0xff]
    %v136 = vld [vmem:[#allocation7 + $0xc0] sm:$0xff]
    %v137 = vld [vmem:[#allocation7 + $0xc8] sm:$0xff]
    %v138 = vld [vmem:[#allocation7 + $0xd0] sm:$0xff]
    %v139 = vld [vmem:[#allocation7 + $0xd8] sm:$0xff]
    %v140 = vld [vmem:[#allocation7 + $0xe0] sm:$0xff]
    %v141 = vld [vmem:[#allocation7 + $0xe8] sm:$0xff]
    %v142 = vld [vmem:[#allocation7 + $0xf0] sm:$0xff]
    %v143 = vld [vmem:[#allocation7 + $0xf8] sm:$0xff]
    %v144 = vld [vmem:[#allocation7 + $0x100] sm:$0xff]
    %v145 = vld [vmem:[#allocation7 + $0x108] sm:$0xff]
    %v146 = vld [vmem:[#allocation7 + $0x110] sm:$0xff]
    %v147 = vld [vmem:[#allocation7 + $0x118] sm:$0xff]
    %v148 = vld [vmem:[#allocation7 + $0x120] sm:$0xff]
    %v149 = vld [vmem:[#allocation7 + $0x128] sm:$0xff]
    %v150 = vld [vmem:[#allocation7 + $0x130] sm:$0xff]
    %v151 = vld [vmem:[#allocation7 + $0x138] sm:$0xff]
    %v152 = vld [vmem:[#allocation7 + $0x140] sm:$0xff]
    %v153 = vld [vmem:[#allocation7 + $0x148] sm:$0xff]
    %v154 = vld [vmem:[#allocation7 + $0x150] sm:$0xff]
    %v155 = vld [vmem:[#allocation7 + $0x158] sm:$0xff]
    %v156 = vld [vmem:[#allocation7 + $0x160] sm:$0xff]
    %v157 = vld [vmem:[#allocation7 + $0x168] sm:$0xff]
    %v158 = vld [vmem:[#allocation7 + $0x170] sm:$0xff]
    %v159 = vld [vmem:[#allocation7 + $0x178] sm:$0xff]
    %v160 = vld [vmem:[#allocation7 + $0x180] sm:$0xff]
    %v161 = vld [vmem:[#allocation7 + $0x188] sm:$0xff]
    %v162 = vld [vmem:[#allocation7 + $0x190] sm:$0xff]
    %v163 = vld [vmem:[#allocation7 + $0x198] sm:$0xff]
    %v164 = vld [vmem:[#allocation7 + $0x1a0] sm:$0xff]
    %v165 = vld [vmem:[#allocation7 + $0x1a8] sm:$0xff]
    %v166 = vld [vmem:[#allocation7 + $0x1b0] sm:$0xff]
    %v167 = vld [vmem:[#allocation7 + $0x1b8] sm:$0xff]
    %v168 = vld [vmem:[#allocation7 + $0x1c0] sm:$0xff]
    %v169 = vld [vmem:[#allocation7 + $0x1c8] sm:$0xff]
    %v170 = vld [vmem:[#allocation7 + $0x1d0] sm:$0xff]
    %v171 = vld [vmem:[#allocation7 + $0x1d8] sm:$0xff]
    %v172 = vld [vmem:[#allocation7 + $0x1e0] sm:$0xff]
    %v173 = vld [vmem:[#allocation7 + $0x1e8] sm:$0xff]
    %v174 = vld [vmem:[#allocation7 + $0x1f0] sm:$0xff]
    %v175 = vld [vmem:[#allocation7 + $0x1f8] sm:$0xff]
    %v176 = vld [vmem:[#allocation2] sm:$0xf]
    %v177 = vld [vmem:[#allocation2 + $0x4] sm:$0xf]
    %v178 = vld [vmem:[#allocation2 + $0x8] sm:$0xf]
    %v179 = vld [vmem:[#allocation2 + $0xc] sm:$0xf]
    %v180 = vld [vmem:[#allocation2 + $0x10] sm:$0xf]
    %v181 = vld [vmem:[#allocation2 + $0x14] sm:$0xf]
    %v182 = vld [vmem:[#allocation2 + $0x18] sm:$0xf]
    %v183 = vld [vmem:[#allocation2 + $0x1c] sm:$0xf]
    %v184 = vld [vmem:[#allocation2 + $0x20] sm:$0xf]
    %v185 = vld [vmem:[#allocation2 + $0x24] sm:$0xf]
    %v186 = vld [vmem:[#allocation2 + $0x28] sm:$0xf]
    %v187 = vld [vmem:[#allocation2 + $0x2c] sm:$0xf]
    %v188 = vld [vmem:[#allocation2 + $0x30] sm:$0xf]
    %v189 = vld [vmem:[#allocation2 + $0x34] sm:$0xf]
    %v190 = vld [vmem:[#allocation2 + $0x38] sm:$0xf]
    %v191 = vld [vmem:[#allocation2 + $0x3c] sm:$0xf]
    %v192 = vld [vmem:[#allocation2 + $0x40] sm:$0xf]
    %v193 = vld [vmem:[#allocation2 + $0x44] sm:$0xf]
    %v194 = vld [vmem:[#allocation2 + $0x48] sm:$0xf]
    %v195 = vld [vmem:[#allocation2 + $0x4c] sm:$0xf]
    %v196 = vld [vmem:[#allocation2 + $0x50] sm:$0xf]
    %v197 = vld [vmem:[#allocation2 + $0x54] sm:$0xf]
    %v198 = vld [vmem:[#allocation2 + $0x58] sm:$0xf]
    %v199 = vld [vmem:[#allocation2 + $0x5c] sm:$0xf]
    %v200 = vld [vmem:[#allocation2 + $0x60] sm:$0xf]
    %v201 = vld [vmem:[#allocation2 + $0x64] sm:$0xf]
    %v202 = vld [vmem:[#allocation2 + $0x68] sm:$0xf]
    %v203 = vld [vmem:[#allocation2 + $0x6c] sm:$0xf]
    %v204 = vld [vmem:[#allocation2 + $0x70] sm:$0xf]
    %v205 = vld [vmem:[#allocation2 + $0x74] sm:$0xf]
    %v206 = vld [vmem:[#allocation2 + $0x78] sm:$0xf]
    %v207 = vld [vmem:[#allocation2 + $0x7c] sm:$0xf]
    %v208 = vld [vmem:[#allocation2 + $0x80] sm:$0xf]
    %v209 = vld [vmem:[#allocation2 + $0x84] sm:$0xf]
    %v210 = vld [vmem:[#allocation2 + $0x88] sm:$0xf]
    %v211 = vld [vmem:[#allocation2 + $0x8c] sm:$0xf]
    %v212 = vld [vmem:[#allocation2 + $0x90] sm:$0xf]
    %v213 = vld [vmem:[#allocation2 + $0x94] sm:$0xf]
    %v214 = vld [vmem:[#allocation2 + $0x98] sm:$0xf]
    %v215 = vld [vmem:[#allocation2 + $0x9c] sm:$0xf]
    %v216 = vld [vmem:[#allocation2 + $0xa0] sm:$0xf]
    %v217 = vld [vmem:[#allocation2 + $0xa4] sm:$0xf]
    %v218 = vld [vmem:[#allocation2 + $0xa8] sm:$0xf]
    %v219 = vld [vmem:[#allocation2 + $0xac] sm:$0xf]
    %v220 = vld [vmem:[#allocation2 + $0xb0] sm:$0xf]
    %v221 = vld [vmem:[#allocation2 + $0xb4] sm:$0xf]
    %v222 = vld [vmem:[#allocation2 + $0xb8] sm:$0xf]
    %v223 = vld [vmem:[#allocation2 + $0xbc] sm:$0xf]
    %v224 = vld [vmem:[#allocation2 + $0xc0] sm:$0xf]
    %v225 = vld [vmem:[#allocation2 + $0xc4] sm:$0xf]
    %v226 = vld [vmem:[#allocation2 + $0xc8] sm:$0xf]
    %v227 = vld [vmem:[#allocation2 + $0xcc] sm:$0xf]
    %v228 = vld [vmem:[#allocation2 + $0xd0] sm:$0xf]
    %v229 = vld [vmem:[#allocation2 + $0xd4] sm:$0xf]
    %v230 = vld [vmem:[#allocation2 + $0xd8] sm:$0xf]
    %v231 = vld [vmem:[#allocation2 + $0xdc] sm:$0xf]
    %v232 = vld [vmem:[#allocation2 + $0xe0] sm:$0xf]
    %v233 = vld [vmem:[#allocation2 + $0xe4] sm:$0xf]
    %v234 = vld [vmem:[#allocation2 + $0xe8] sm:$0xf]
    %v235 = vld [vmem:[#allocation2 + $0xec] sm:$0xf]
    %v236 = vld [vmem:[#allocation2 + $0xf0] sm:$0xf]
    %v237 = vld [vmem:[#allocation2 + $0xf4] sm:$0xf]
    %v238 = vld [vmem:[#allocation2 + $0xf8] sm:$0xf]
    %v239 = vld [vmem:[#allocation2 + $0xfc] sm:$0xf]
    %v240 = vld [vmem:[#allocation5] sm:$0xf]
    %v241 = vld [vmem:[#allocation5 + $0x4] sm:$0xf]
    %v242 = vld [vmem:[#allocation5 + $0x8] sm:$0xf]
    %v243 = vld [vmem:[#allocation5 + $0xc] sm:$0xf]
    %v244 = vld [vmem:[#allocation5 + $0x10] sm:$0xf]
    %v245 = vld [vmem:[#allocation5 + $0x14] sm:$0xf]
    %v246 = vld [vmem:[#allocation5 + $0x18] sm:$0xf]
    %v247 = vld [vmem:[#allocation5 + $0x1c] sm:$0xf]
    %v248 = vld [vmem:[#allocation5 + $0x20] sm:$0xf]
    %v249 = vld [vmem:[#allocation5 + $0x24] sm:$0xf]
    %v250 = vld [vmem:[#allocation5 + $0x28] sm:$0xf]
    %v251 = vld [vmem:[#allocation5 + $0x2c] sm:$0xf]
    %v252 = vld [vmem:[#allocation5 + $0x30] sm:$0xf]
    %v253 = vld [vmem:[#allocation5 + $0x34] sm:$0xf]
    %v254 = vld [vmem:[#allocation5 + $0x38] sm:$0xf]
    %v255 = vld [vmem:[#allocation5 + $0x3c] sm:$0xf]
    %v320 = vunpack.c.l.b16 %v176
    %v321 = vunpack.c.l.b16 %v177
    %v322 = vunpack.c.l.b16 %v178
    %v323 = vunpack.c.l.b16 %v179
    %v324 = vunpack.c.l.b16 %v180
    %v325 = vunpack.c.l.b16 %v181
    %v326 = vunpack.c.l.b16 %v182
    %v327 = vunpack.c.l.b16 %v183
    %v328 = vunpack.c.l.b16 %v184
    %v329 = vunpack.c.l.b16 %v185
    %v330 = vunpack.c.l.b16 %v186
    %v331 = vunpack.c.l.b16 %v187
    %v332 = vunpack.c.l.b16 %v188
    %v333 = vunpack.c.l.b16 %v189
    %v334 = vunpack.c.l.b16 %v190
    %v335 = vunpack.c.l.b16 %v191
    %v336 = vunpack.c.l.b16 %v192
    %v337 = vunpack.c.l.b16 %v193
    %v338 = vunpack.c.l.b16 %v194
    %v339 = vunpack.c.l.b16 %v195
    %v340 = vunpack.c.l.b16 %v196
    %v341 = vunpack.c.l.b16 %v197
    %v342 = vunpack.c.l.b16 %v198
    %v343 = vunpack.c.l.b16 %v199
    %v344 = vunpack.c.l.b16 %v200
    %v345 = vunpack.c.l.b16 %v201
    %v346 = vunpack.c.l.b16 %v202
    %v347 = vunpack.c.l.b16 %v203
    %v348 = vunpack.c.l.b16 %v204
    %v349 = vunpack.c.l.b16 %v205
    %v350 = vunpack.c.l.b16 %v206
    %v351 = vunpack.c.l.b16 %v207
    %v352 = vunpack.c.l.b16 %v208
    %v353 = vunpack.c.l.b16 %v209
    %v354 = vunpack.c.l.b16 %v210
    %v355 = vunpack.c.l.b16 %v211
    %v356 = vunpack.c.l.b16 %v212
    %v357 = vunpack.c.l.b16 %v213
    %v358 = vunpack.c.l.b16 %v214
    %v359 = vunpack.c.l.b16 %v215
    %v360 = vunpack.c.l.b16 %v216
    %v361 = vunpack.c.l.b16 %v217
    %v362 = vunpack.c.l.b16 %v218
    %v363 = vunpack.c.l.b16 %v219
    %v364 = vunpack.c.l.b16 %v220
    %v365 = vunpack.c.l.b16 %v221
    %v366 = vunpack.c.l.b16 %v222
    %v367 = vunpack.c.l.b16 %v223
    %v368 = vunpack.c.l.b16 %v224
    %v369 = vunpack.c.l.b16 %v225
    %v370 = vunpack.c.l.b16 %v226
    %v371 = vunpack.c.l.b16 %v227
    %v372 = vunpack.c.l.b16 %v228
    %v373 = vunpack.c.l.b16 %v229
    %v374 = vunpack.c.l.b16 %v230
    %v375 = vunpack.c.l.b16 %v231
    %v376 = vunpack.c.l.b16 %v232
    %v377 = vunpack.c.l.b16 %v233
    %v378 = vunpack.c.l.b16 %v234
    %v379 = vunpack.c.l.b16 %v235
    %v380 = vunpack.c.l.b16 %v236
    %v381 = vunpack.c.l.b16 %v237
    %v382 = vunpack.c.l.b16 %v238
    %v383 = vunpack.c.l.b16 %v239
    %v384 = vpack.c.b16 %v321, %v320
    %v385 = vpack.c.b16 %v323, %v322
    %v386 = vpack.c.b16 %v325, %v324
    %v387 = vpack.c.b16 %v327, %v326
    %v388 = vpack.c.b16 %v329, %v328
    %v389 = vpack.c.b16 %v331, %v330
    %v390 = vpack.c.b16 %v333, %v332
    %v391 = vpack.c.b16 %v335, %v334
    %v392 = vpack.c.b16 %v337, %v336
    %v393 = vpack.c.b16 %v339, %v338
    %v394 = vpack.c.b16 %v341, %v340
    %v395 = vpack.c.b16 %v343, %v342
    %v396 = vpack.c.b16 %v345, %v344
    %v397 = vpack.c.b16 %v347, %v346
    %v398 = vpack.c.b16 %v349, %v348
    %v399 = vpack.c.b16 %v351, %v350
    %v400 = vpack.c.b16 %v353, %v352
    %v401 = vpack.c.b16 %v355, %v354
    %v402 = vpack.c.b16 %v357, %v356
    %v403 = vpack.c.b16 %v359, %v358
    %v404 = vpack.c.b16 %v361, %v360
    %v405 = vpack.c.b16 %v363, %v362
    %v406 = vpack.c.b16 %v365, %v364
    %v407 = vpack.c.b16 %v367, %v366
    %v408 = vpack.c.b16 %v369, %v368
    %v409 = vpack.c.b16 %v371, %v370
    %v410 = vpack.c.b16 %v373, %v372
    %v411 = vpack.c.b16 %v375, %v374
    %v412 = vpack.c.b16 %v377, %v376
    %v413 = vpack.c.b16 %v379, %v378
    %v414 = vpack.c.b16 %v381, %v380
    %v415 = vpack.c.b16 %v383, %v382
    %v464 = vunpack.c.l.b16 %v240
    %v465 = vunpack.c.l.b16 %v241
    %v466 = vunpack.c.l.b16 %v242
    %v467 = vunpack.c.l.b16 %v243
    %v468 = vunpack.c.l.b16 %v244
    %v469 = vunpack.c.l.b16 %v245
    %v470 = vunpack.c.l.b16 %v246
    %v471 = vunpack.c.l.b16 %v247
    %v472 = vunpack.c.l.b16 %v248
    %v473 = vunpack.c.l.b16 %v249
    %v474 = vunpack.c.l.b16 %v250
    %v475 = vunpack.c.l.b16 %v251
    %v476 = vunpack.c.l.b16 %v252
    %v477 = vunpack.c.l.b16 %v253
    %v478 = vunpack.c.l.b16 %v254
    %v479 = vunpack.c.l.b16 %v255
    %v480 = vpack.c.b16 %v465, %v464
    %v481 = vpack.c.b16 %v467, %v466
    %v482 = vpack.c.b16 %v469, %v468
    %v483 = vpack.c.b16 %v471, %v470
    %v484 = vpack.c.b16 %v473, %v472
    %v485 = vpack.c.b16 %v475, %v474
    %v486 = vpack.c.b16 %v477, %v476
    %v487 = vpack.c.b16 %v479, %v478
    %496 = vmatprep.subr.bf16.mxu0 0
    %497 = vmatpush1.bf16.msra.mxu0 %v487
    %498 = vmatprep.subr.bf16.mxu0 0
    %499 = vmatpush1.bf16.msra.mxu0 %v486
    %500 = vmatprep.subr.bf16.mxu0 0
    %501 = vmatpush1.bf16.msra.mxu0 %v485
    %502 = vmatprep.subr.bf16.mxu0 0
    %503 = vmatpush1.bf16.msra.mxu0 %v484
    %504 = vmatprep.subr.bf16.mxu0 0
    %505 = vmatpush1.bf16.msra.mxu0 %v483
    %506 = vmatprep.subr.bf16.mxu0 0
    %507 = vmatpush1.bf16.msra.mxu0 %v482
    %508 = vmatprep.subr.bf16.mxu0 0
    %509 = vmatpush1.bf16.msra.mxu0 %v481
    %510 = vmatprep.subr.bf16.mxu0 0
    %511 = vmatpush1.bf16.msra.mxu0 %v480
    %512 = vmatprep.subr.bf16.mxu0 0
    %513 = vmatpush2.bf16.msra.mxu0 0
    %514 = vmatprep.subr.bf16.mxu0 0
    %515 = vmatpush2.bf16.msra.mxu0 0
    %516 = vmatprep.subr.bf16.mxu0 0
    %517 = vmatpush2.bf16.msra.mxu0 0
    %518 = vmatprep.subr.bf16.mxu0 0
    %519 = vmatpush2.bf16.msra.mxu0 0
    %520 = vmatprep.subr.bf16.mxu0 0
    %521 = vmatpush2.bf16.msra.mxu0 0
    %522 = vmatprep.subr.bf16.mxu0 0
    %523 = vmatpush2.bf16.msra.mxu0 0
    %524 = vmatprep.subr.bf16.mxu0 0
    %525 = vmatpush2.bf16.msra.mxu0 0
    %526 = vmatprep.subr.bf16.mxu0 0
    %527 = vmatpush2.bf16.msra.mxu0 0
    %528 = vmatprep.mubr.bf16.mxu0 0
    %529 = vmatmul.mubr.bf16.gmra.mxu0 %v384
    %v530 = vpop.f32.mrf.mxu0
    %v531 = vadd.f32 0.0, %v530
    %v532 = vpop.f32.mrf.mxu0
    %v533 = vpop.f32.mrf.mxu0
    %v534 = vadd.f32 0.0, %v533
    %v535 = vpop.f32.mrf.mxu0
    %536 = vmatprep.mubr.bf16.mxu0 0
    %537 = vmatmul.mubr.bf16.gmra.mxu0 %v385
    %v538 = vpop.f32.mrf.mxu0
    %v539 = vadd.f32 0.0, %v538
    %v540 = vpop.f32.mrf.mxu0
    %v541 = vpop.f32.mrf.mxu0
    %v542 = vadd.f32 0.0, %v541
    %v543 = vpop.f32.mrf.mxu0
    %544 = vmatprep.mubr.bf16.mxu0 0
    %545 = vmatmul.mubr.bf16.gmra.mxu0 %v386
    %v546 = vpop.f32.mrf.mxu0
    %v547 = vadd.f32 0.0, %v546
    %v548 = vpop.f32.mrf.mxu0
    %v549 = vpop.f32.mrf.mxu0
    %v550 = vadd.f32 0.0, %v549
    %v551 = vpop.f32.mrf.mxu0
    %552 = vmatprep.mubr.bf16.mxu0 0
    %553 = vmatmul.mubr.bf16.gmra.mxu0 %v387
    %v554 = vpop.f32.mrf.mxu0
    %v555 = vadd.f32 0.0, %v554
    %v556 = vpop.f32.mrf.mxu0
    %v557 = vpop.f32.mrf.mxu0
    %v558 = vadd.f32 0.0, %v557
    %v559 = vpop.f32.mrf.mxu0
    %560 = vmatprep.mubr.bf16.mxu0 0
    %561 = vmatmul.mubr.bf16.gmra.mxu0 %v388
    %v562 = vpop.f32.mrf.mxu0
    %v563 = vadd.f32 0.0, %v562
    %v564 = vpop.f32.mrf.mxu0
    %v565 = vpop.f32.mrf.mxu0
    %v566 = vadd.f32 0.0, %v565
    %v567 = vpop.f32.mrf.mxu0
    %568 = vmatprep.mubr.bf16.mxu0 0
    %569 = vmatmul.mubr.bf16.gmra.mxu0 %v389
    %v570 = vpop.f32.mrf.mxu0
    %v571 = vadd.f32 0.0, %v570
    %v572 = vpop.f32.mrf.mxu0
    %v573 = vpop.f32.mrf.mxu0
    %v574 = vadd.f32 0.0, %v573
    %v575 = vpop.f32.mrf.mxu0
    %576 = vmatprep.mubr.bf16.mxu0 0
    %577 = vmatmul.mubr.bf16.gmra.mxu0 %v390
    %v578 = vpop.f32.mrf.mxu0
    %v579 = vadd.f32 0.0, %v578
    %v580 = vpop.f32.mrf.mxu0
    %v581 = vpop.f32.mrf.mxu0
    %v582 = vadd.f32 0.0, %v581
    %v583 = vpop.f32.mrf.mxu0
    %584 = vmatprep.mubr.bf16.mxu0 0
    %585 = vmatmul.mubr.bf16.gmra.mxu0 %v391
    %v586 = vpop.f32.mrf.mxu0
    %v587 = vadd.f32 0.0, %v586
    %v588 = vpop.f32.mrf.mxu0
    %v589 = vpop.f32.mrf.mxu0
    %v590 = vadd.f32 0.0, %v589
    %v591 = vpop.f32.mrf.mxu0
    %592 = vmatprep.mubr.bf16.mxu0 0
    %593 = vmatmul.mubr.bf16.gmra.mxu0 %v392
    %v594 = vpop.f32.mrf.mxu0
    %v595 = vadd.f32 0.0, %v594
    %v596 = vpop.f32.mrf.mxu0
    %v597 = vpop.f32.mrf.mxu0
    %v598 = vadd.f32 0.0, %v597
    %v599 = vpop.f32.mrf.mxu0
    %600 = vmatprep.mubr.bf16.mxu0 0
    %601 = vmatmul.mubr.bf16.gmra.mxu0 %v393
    %v602 = vpop.f32.mrf.mxu0
    %v603 = vadd.f32 0.0, %v602
    %v604 = vpop.f32.mrf.mxu0
    %v605 = vpop.f32.mrf.mxu0
    %v606 = vadd.f32 0.0, %v605
    %v607 = vpop.f32.mrf.mxu0
    %608 = vmatprep.mubr.bf16.mxu0 0
    %609 = vmatmul.mubr.bf16.gmra.mxu0 %v394
    %v610 = vpop.f32.mrf.mxu0
    %v611 = vadd.f32 0.0, %v610
    %v612 = vpop.f32.mrf.mxu0
    %v613 = vpop.f32.mrf.mxu0
    %v614 = vadd.f32 0.0, %v613
    %v615 = vpop.f32.mrf.mxu0
    %616 = vmatprep.mubr.bf16.mxu0 0
    %617 = vmatmul.mubr.bf16.gmra.mxu0 %v395
    %v618 = vpop.f32.mrf.mxu0
    %v619 = vadd.f32 0.0, %v618
    %v620 = vpop.f32.mrf.mxu0
    %v621 = vpop.f32.mrf.mxu0
    %v622 = vadd.f32 0.0, %v621
    %v623 = vpop.f32.mrf.mxu0
    %624 = vmatprep.mubr.bf16.mxu0 0
    %625 = vmatmul.mubr.bf16.gmra.mxu0 %v396
    %v626 = vpop.f32.mrf.mxu0
    %v627 = vadd.f32 0.0, %v626
    %v628 = vpop.f32.mrf.mxu0
    %v629 = vpop.f32.mrf.mxu0
    %v630 = vadd.f32 0.0, %v629
    %v631 = vpop.f32.mrf.mxu0
    %632 = vmatprep.mubr.bf16.mxu0 0
    %633 = vmatmul.mubr.bf16.gmra.mxu0 %v397
    %v634 = vpop.f32.mrf.mxu0
    %v635 = vadd.f32 0.0, %v634
    %v636 = vpop.f32.mrf.mxu0
    %v637 = vpop.f32.mrf.mxu0
    %v638 = vadd.f32 0.0, %v637
    %v639 = vpop.f32.mrf.mxu0
    %640 = vmatprep.mubr.bf16.mxu0 0
    %641 = vmatmul.mubr.bf16.gmra.mxu0 %v398
    %v642 = vpop.f32.mrf.mxu0
    %v643 = vadd.f32 0.0, %v642
    %v644 = vpop.f32.mrf.mxu0
    %v645 = vpop.f32.mrf.mxu0
    %v646 = vadd.f32 0.0, %v645
    %v647 = vpop.f32.mrf.mxu0
    %648 = vmatprep.mubr.bf16.mxu0 0
    %649 = vmatmul.mubr.bf16.gmra.mxu0 %v399
    %v650 = vpop.f32.mrf.mxu0
    %v651 = vadd.f32 0.0, %v650
    %v652 = vpop.f32.mrf.mxu0
    %v653 = vpop.f32.mrf.mxu0
    %v654 = vadd.f32 0.0, %v653
    %v655 = vpop.f32.mrf.mxu0
    %656 = vmatprep.mubr.bf16.mxu0 0
    %657 = vmatmul.mubr.bf16.gmra.mxu0 %v400
    %v658 = vpop.f32.mrf.mxu0
    %v659 = vadd.f32 0.0, %v658
    %v660 = vpop.f32.mrf.mxu0
    %v661 = vpop.f32.mrf.mxu0
    %v662 = vadd.f32 0.0, %v661
    %v663 = vpop.f32.mrf.mxu0
    %664 = vmatprep.mubr.bf16.mxu0 0
    %665 = vmatmul.mubr.bf16.gmra.mxu0 %v401
    %v666 = vpop.f32.mrf.mxu0
    %v667 = vadd.f32 0.0, %v666
    %v668 = vpop.f32.mrf.mxu0
    %v669 = vpop.f32.mrf.mxu0
    %v670 = vadd.f32 0.0, %v669
    %v671 = vpop.f32.mrf.mxu0
    %672 = vmatprep.mubr.bf16.mxu0 0
    %673 = vmatmul.mubr.bf16.gmra.mxu0 %v402
    %v674 = vpop.f32.mrf.mxu0
    %v675 = vadd.f32 0.0, %v674
    %v676 = vpop.f32.mrf.mxu0
    %v677 = vpop.f32.mrf.mxu0
    %v678 = vadd.f32 0.0, %v677
    %v679 = vpop.f32.mrf.mxu0
    %680 = vmatprep.mubr.bf16.mxu0 0
    %681 = vmatmul.mubr.bf16.gmra.mxu0 %v403
    %v682 = vpop.f32.mrf.mxu0
    %v683 = vadd.f32 0.0, %v682
    %v684 = vpop.f32.mrf.mxu0
    %v685 = vpop.f32.mrf.mxu0
    %v686 = vadd.f32 0.0, %v685
    %v687 = vpop.f32.mrf.mxu0
    %688 = vmatprep.mubr.bf16.mxu0 0
    %689 = vmatmul.mubr.bf16.gmra.mxu0 %v404
    %v690 = vpop.f32.mrf.mxu0
    %v691 = vadd.f32 0.0, %v690
    %v692 = vpop.f32.mrf.mxu0
    %v693 = vpop.f32.mrf.mxu0
    %v694 = vadd.f32 0.0, %v693
    %v695 = vpop.f32.mrf.mxu0
    %696 = vmatprep.mubr.bf16.mxu0 0
    %697 = vmatmul.mubr.bf16.gmra.mxu0 %v405
    %v698 = vpop.f32.mrf.mxu0
    %v699 = vadd.f32 0.0, %v698
    %v700 = vpop.f32.mrf.mxu0
    %v701 = vpop.f32.mrf.mxu0
    %v702 = vadd.f32 0.0, %v701
    %v703 = vpop.f32.mrf.mxu0
    %704 = vmatprep.mubr.bf16.mxu0 0
    %705 = vmatmul.mubr.bf16.gmra.mxu0 %v406
    %v706 = vpop.f32.mrf.mxu0
    %v707 = vadd.f32 0.0, %v706
    %v708 = vpop.f32.mrf.mxu0
    %v709 = vpop.f32.mrf.mxu0
    %v710 = vadd.f32 0.0, %v709
    %v711 = vpop.f32.mrf.mxu0
    %712 = vmatprep.mubr.bf16.mxu0 0
    %713 = vmatmul.mubr.bf16.gmra.mxu0 %v407
    %v714 = vpop.f32.mrf.mxu0
    %v715 = vadd.f32 0.0, %v714
    %v716 = vpop.f32.mrf.mxu0
    %v717 = vpop.f32.mrf.mxu0
    %v718 = vadd.f32 0.0, %v717
    %v719 = vpop.f32.mrf.mxu0
    %720 = vmatprep.mubr.bf16.mxu0 0
    %721 = vmatmul.mubr.bf16.gmra.mxu0 %v408
    %v722 = vpop.f32.mrf.mxu0
    %v723 = vadd.f32 0.0, %v722
    %v724 = vpop.f32.mrf.mxu0
    %v725 = vpop.f32.mrf.mxu0
    %v726 = vadd.f32 0.0, %v725
    %v727 = vpop.f32.mrf.mxu0
    %728 = vmatprep.mubr.bf16.mxu0 0
    %729 = vmatmul.mubr.bf16.gmra.mxu0 %v409
    %v730 = vpop.f32.mrf.mxu0
    %v731 = vadd.f32 0.0, %v730
    %v732 = vpop.f32.mrf.mxu0
    %v733 = vpop.f32.mrf.mxu0
    %v734 = vadd.f32 0.0, %v733
    %v735 = vpop.f32.mrf.mxu0
    %736 = vmatprep.mubr.bf16.mxu0 0
    %737 = vmatmul.mubr.bf16.gmra.mxu0 %v410
    %v738 = vpop.f32.mrf.mxu0
    %v739 = vadd.f32 0.0, %v738
    %v740 = vpop.f32.mrf.mxu0
    %v741 = vpop.f32.mrf.mxu0
    %v742 = vadd.f32 0.0, %v741
    %v743 = vpop.f32.mrf.mxu0
    %744 = vmatprep.mubr.bf16.mxu0 0
    %745 = vmatmul.mubr.bf16.gmra.mxu0 %v411
    %v746 = vpop.f32.mrf.mxu0
    %v747 = vadd.f32 0.0, %v746
    %v748 = vpop.f32.mrf.mxu0
    %v749 = vpop.f32.mrf.mxu0
    %v750 = vadd.f32 0.0, %v749
    %v751 = vpop.f32.mrf.mxu0
    %752 = vmatprep.mubr.bf16.mxu0 0
    %753 = vmatmul.mubr.bf16.gmra.mxu0 %v412
    %v754 = vpop.f32.mrf.mxu0
    %v755 = vadd.f32 0.0, %v754
    %v756 = vpop.f32.mrf.mxu0
    %v757 = vpop.f32.mrf.mxu0
    %v758 = vadd.f32 0.0, %v757
    %v759 = vpop.f32.mrf.mxu0
    %760 = vmatprep.mubr.bf16.mxu0 0
    %761 = vmatmul.mubr.bf16.gmra.mxu0 %v413
    %v762 = vpop.f32.mrf.mxu0
    %v763 = vadd.f32 0.0, %v762
    %v764 = vpop.f32.mrf.mxu0
    %v765 = vpop.f32.mrf.mxu0
    %v766 = vadd.f32 0.0, %v765
    %v767 = vpop.f32.mrf.mxu0
    %768 = vmatprep.mubr.bf16.mxu0 0
    %769 = vmatmul.mubr.bf16.gmra.mxu0 %v414
    %v770 = vpop.f32.mrf.mxu0
    %v771 = vadd.f32 0.0, %v770
    %v772 = vpop.f32.mrf.mxu0
    %v773 = vpop.f32.mrf.mxu0
    %v774 = vadd.f32 0.0, %v773
    %v775 = vpop.f32.mrf.mxu0
    %776 = vmatprep.mubr.bf16.mxu0 0
    %777 = vmatmul.mubr.bf16.gmra.mxu0 %v415
    %v778 = vpop.f32.mrf.mxu0
    %v779 = vadd.f32 0.0, %v778
    %v780 = vpop.f32.mrf.mxu0
    %v781 = vpop.f32.mrf.mxu0
    %v782 = vadd.f32 0.0, %v781
    %v783 = vpop.f32.mrf.mxu0
    %784 = vdwg.mxu0
    %v785 = vadd.f32 %v112, %v531
    %v786 = vadd.f32 %v113, %v534
    %v787 = vadd.f32 %v114, %v539
    %v788 = vadd.f32 %v115, %v542
    %v789 = vadd.f32 %v116, %v547
    %v790 = vadd.f32 %v117, %v550
    %v791 = vadd.f32 %v118, %v555
    %v792 = vadd.f32 %v119, %v558
    %v793 = vadd.f32 %v120, %v563
    %v794 = vadd.f32 %v121, %v566
    %v795 = vadd.f32 %v122, %v571
    %v796 = vadd.f32 %v123, %v574
    %v797 = vadd.f32 %v124, %v579
    %v798 = vadd.f32 %v125, %v582
    %v799 = vadd.f32 %v126, %v587
    %v800 = vadd.f32 %v127, %v590
    %v801 = vadd.f32 %v128, %v595
    %v802 = vadd.f32 %v129, %v598
    %v803 = vadd.f32 %v130, %v603
    %v804 = vadd.f32 %v131, %v606
    %v805 = vadd.f32 %v132, %v611
    %v806 = vadd.f32 %v133, %v614
    %v807 = vadd.f32 %v134, %v619
    %v808 = vadd.f32 %v135, %v622
    %v809 = vadd.f32 %v136, %v627
    %v810 = vadd.f32 %v137, %v630
    %v811 = vadd.f32 %v138, %v635
    %v812 = vadd.f32 %v139, %v638
    %v813 = vadd.f32 %v140, %v643
    %v814 = vadd.f32 %v141, %v646
    %v815 = vadd.f32 %v142, %v651
    %v816 = vadd.f32 %v143, %v654
    %v817 = vadd.f32 %v144, %v659
    %v818 = vadd.f32 %v145, %v662
    %v819 = vadd.f32 %v146, %v667
    %v820 = vadd.f32 %v147, %v670
    %v821 = vadd.f32 %v148, %v675
    %v822 = vadd.f32 %v149, %v678
    %v823 = vadd.f32 %v150, %v683
    %v824 = vadd.f32 %v151, %v686
    %v825 = vadd.f32 %v152, %v691
    %v826 = vadd.f32 %v153, %v694
    %v827 = vadd.f32 %v154, %v699
    %v828 = vadd.f32 %v155, %v702
    %v829 = vadd.f32 %v156, %v707
    %v830 = vadd.f32 %v157, %v710
    %v831 = vadd.f32 %v158, %v715
    %v832 = vadd.f32 %v159, %v718
    %v833 = vadd.f32 %v160, %v723
    %v834 = vadd.f32 %v161, %v726
    %v835 = vadd.f32 %v162, %v731
    %v836 = vadd.f32 %v163, %v734
    %v837 = vadd.f32 %v164, %v739
    %v838 = vadd.f32 %v165, %v742
    %v839 = vadd.f32 %v166, %v747
    %v840 = vadd.f32 %v167, %v750
    %v841 = vadd.f32 %v168, %v755
    %v842 = vadd.f32 %v169, %v758
    %v843 = vadd.f32 %v170, %v763
    %v844 = vadd.f32 %v171, %v766
    %v845 = vadd.f32 %v172, %v771
    %v846 = vadd.f32 %v173, %v774
    %v847 = vadd.f32 %v174, %v779
    %v848 = vadd.f32 %v175, %v782
    %849 = vst [vmem:[#allocation7] sm:$0xff] %v785
    %850 = vst [vmem:[#allocation7 + $0x8] sm:$0xff] %v786
    %851 = vst [vmem:[#allocation7 + $0x10] sm:$0xff] %v787
    %852 = vst [vmem:[#allocation7 + $0x18] sm:$0xff] %v788
    %853 = vst [vmem:[#allocation7 + $0x20] sm:$0xff] %v789
    %854 = vst [vmem:[#allocation7 + $0x28] sm:$0xff] %v790
    %855 = vst [vmem:[#allocation7 + $0x30] sm:$0xff] %v791
    %856 = vst [vmem:[#allocation7 + $0x38] sm:$0xff] %v792
    %857 = vst [vmem:[#allocation7 + $0x40] sm:$0xff] %v793
    %858 = vst [vmem:[#allocation7 + $0x48] sm:$0xff] %v794
    %859 = vst [vmem:[#allocation7 + $0x50] sm:$0xff] %v795
    %860 = vst [vmem:[#allocation7 + $0x58] sm:$0xff] %v796
    %861 = vst [vmem:[#allocation7 + $0x60] sm:$0xff] %v797
    %862 = vst [vmem:[#allocation7 + $0x68] sm:$0xff] %v798
    %863 = vst [vmem:[#allocation7 + $0x70] sm:$0xff] %v799
    %864 = vst [vmem:[#allocation7 + $0x78] sm:$0xff] %v800
    %865 = vst [vmem:[#allocation7 + $0x80] sm:$0xff] %v801
    %866 = vst [vmem:[#allocation7 + $0x88] sm:$0xff] %v802
    %867 = vst [vmem:[#allocation7 + $0x90] sm:$0xff] %v803
    %868 = vst [vmem:[#allocation7 + $0x98] sm:$0xff] %v804
    %869 = vst [vmem:[#allocation7 + $0xa0] sm:$0xff] %v805
    %870 = vst [vmem:[#allocation7 + $0xa8] sm:$0xff] %v806
    %871 = vst [vmem:[#allocation7 + $0xb0] sm:$0xff] %v807
    %872 = vst [vmem:[#allocation7 + $0xb8] sm:$0xff] %v808
    %873 = vst [vmem:[#allocation7 + $0xc0] sm:$0xff] %v809
    %874 = vst [vmem:[#allocation7 + $0xc8] sm:$0xff] %v810
    %875 = vst [vmem:[#allocation7 + $0xd0] sm:$0xff] %v811
    %876 = vst [vmem:[#allocation7 + $0xd8] sm:$0xff] %v812
    %877 = vst [vmem:[#allocation7 + $0xe0] sm:$0xff] %v813
    %878 = vst [vmem:[#allocation7 + $0xe8] sm:$0xff] %v814
    %879 = vst [vmem:[#allocation7 + $0xf0] sm:$0xff] %v815
    %880 = vst [vmem:[#allocation7 + $0xf8] sm:$0xff] %v816
    %881 = vst [vmem:[#allocation7 + $0x100] sm:$0xff] %v817
    %882 = vst [vmem:[#allocation7 + $0x108] sm:$0xff] %v818
    %883 = vst [vmem:[#allocation7 + $0x110] sm:$0xff] %v819
    %884 = vst [vmem:[#allocation7 + $0x118] sm:$0xff] %v820
    %885 = vst [vmem:[#allocation7 + $0x120] sm:$0xff] %v821
    %886 = vst [vmem:[#allocation7 + $0x128] sm:$0xff] %v822
    %887 = vst [vmem:[#allocation7 + $0x130] sm:$0xff] %v823
    %888 = vst [vmem:[#allocation7 + $0x138] sm:$0xff] %v824
    %889 = vst [vmem:[#allocation7 + $0x140] sm:$0xff] %v825
    %890 = vst [vmem:[#allocation7 + $0x148] sm:$0xff] %v826
    %891 = vst [vmem:[#allocation7 + $0x150] sm:$0xff] %v827
    %892 = vst [vmem:[#allocation7 + $0x158] sm:$0xff] %v828
    %893 = vst [vmem:[#allocation7 + $0x160] sm:$0xff] %v829
    %894 = vst [vmem:[#allocation7 + $0x168] sm:$0xff] %v830
    %895 = vst [vmem:[#allocation7 + $0x170] sm:$0xff] %v831
    %896 = vst [vmem:[#allocation7 + $0x178] sm:$0xff] %v832
    %897 = vst [vmem:[#allocation7 + $0x180] sm:$0xff] %v833
    %898 = vst [vmem:[#allocation7 + $0x188] sm:$0xff] %v834
    %899 = vst [vmem:[#allocation7 + $0x190] sm:$0xff] %v835
    %900 = vst [vmem:[#allocation7 + $0x198] sm:$0xff] %v836
    %901 = vst [vmem:[#allocation7 + $0x1a0] sm:$0xff] %v837
    %902 = vst [vmem:[#allocation7 + $0x1a8] sm:$0xff] %v838
    %903 = vst [vmem:[#allocation7 + $0x1b0] sm:$0xff] %v839
    %904 = vst [vmem:[#allocation7 + $0x1b8] sm:$0xff] %v840
    %905 = vst [vmem:[#allocation7 + $0x1c0] sm:$0xff] %v841
    %906 = vst [vmem:[#allocation7 + $0x1c8] sm:$0xff] %v842
    %907 = vst [vmem:[#allocation7 + $0x1d0] sm:$0xff] %v843
    %908 = vst [vmem:[#allocation7 + $0x1d8] sm:$0xff] %v844
    %909 = vst [vmem:[#allocation7 + $0x1e0] sm:$0xff] %v845
    %910 = vst [vmem:[#allocation7 + $0x1e8] sm:$0xff] %v846
    %911 = vst [vmem:[#allocation7 + $0x1f0] sm:$0xff] %v847
    %912 = vst [vmem:[#allocation7 + $0x1f8] sm:$0xff] %v848
    // Predicated region
    $region22: #{tpu_custom_call.1} parent=1 // pred_check
      %p913 = pneg %p44
    $region23: #{tpu_custom_call.1} parent=1 // pred_check_branch
      %915 = sbr.rel (%p913) target = $region25
    $region24: #{tpu_custom_call.1} parent=1 // pred_region
      %v916 = vld [vmem:[#allocation7] sm:$0xff]
      %v917 = vld [vmem:[#allocation7 + $0x8] sm:$0xff]
      %v918 = vld [vmem:[#allocation7 + $0x10] sm:$0xff]
      %v919 = vld [vmem:[#allocation7 + $0x18] sm:$0xff]
      %v920 = vld [vmem:[#allocation7 + $0x20] sm:$0xff]
      %v921 = vld [vmem:[#allocation7 + $0x28] sm:$0xff]
      %v922 = vld [vmem:[#allocation7 + $0x30] sm:$0xff]
      %v923 = vld [vmem:[#allocation7 + $0x38] sm:$0xff]
      %v924 = vld [vmem:[#allocation7 + $0x40] sm:$0xff]
      %v925 = vld [vmem:[#allocation7 + $0x48] sm:$0xff]
      %v926 = vld [vmem:[#allocation7 + $0x50] sm:$0xff]
      %v927 = vld [vmem:[#allocation7 + $0x58] sm:$0xff]
      %v928 = vld [vmem:[#allocation7 + $0x60] sm:$0xff]
      %v929 = vld [vmem:[#allocation7 + $0x68] sm:$0xff]
      %v930 = vld [vmem:[#allocation7 + $0x70] sm:$0xff]
      %v931 = vld [vmem:[#allocation7 + $0x78] sm:$0xff]
      %v932 = vld [vmem:[#allocation7 + $0x80] sm:$0xff]
      %v933 = vld [vmem:[#allocation7 + $0x88] sm:$0xff]
      %v934 = vld [vmem:[#allocation7 + $0x90] sm:$0xff]
      %v935 = vld [vmem:[#allocation7 + $0x98] sm:$0xff]
      %v936 = vld [vmem:[#allocation7 + $0xa0] sm:$0xff]
      %v937 = vld [vmem:[#allocation7 + $0xa8] sm:$0xff]
      %v938 = vld [vmem:[#allocation7 + $0xb0] sm:$0xff]
      %v939 = vld [vmem:[#allocation7 + $0xb8] sm:$0xff]
      %v940 = vld [vmem:[#allocation7 + $0xc0] sm:$0xff]
      %v941 = vld [vmem:[#allocation7 + $0xc8] sm:$0xff]
      %v942 = vld [vmem:[#allocation7 + $0xd0] sm:$0xff]
      %v943 = vld [vmem:[#allocation7 + $0xd8] sm:$0xff]
      %v944 = vld [vmem:[#allocation7 + $0xe0] sm:$0xff]
      %v945 = vld [vmem:[#allocation7 + $0xe8] sm:$0xff]
      %v946 = vld [vmem:[#allocation7 + $0xf0] sm:$0xff]
      %v947 = vld [vmem:[#allocation7 + $0xf8] sm:$0xff]
      %v948 = vld [vmem:[#allocation7 + $0x100] sm:$0xff]
      %v949 = vld [vmem:[#allocation7 + $0x108] sm:$0xff]
      %v950 = vld [vmem:[#allocation7 + $0x110] sm:$0xff]
      %v951 = vld [vmem:[#allocation7 + $0x118] sm:$0xff]
      %v952 = vld [vmem:[#allocation7 + $0x120] sm:$0xff]
      %v953 = vld [vmem:[#allocation7 + $0x128] sm:$0xff]
      %v954 = vld [vmem:[#allocation7 + $0x130] sm:$0xff]
      %v955 = vld [vmem:[#allocation7 + $0x138] sm:$0xff]
      %v956 = vld [vmem:[#allocation7 + $0x140] sm:$0xff]
      %v957 = vld [vmem:[#allocation7 + $0x148] sm:$0xff]
      %v958 = vld [vmem:[#allocation7 + $0x150] sm:$0xff]
      %v959 = vld [vmem:[#allocation7 + $0x158] sm:$0xff]
      %v960 = vld [vmem:[#allocation7 + $0x160] sm:$0xff]
      %v961 = vld [vmem:[#allocation7 + $0x168] sm:$0xff]
      %v962 = vld [vmem:[#allocation7 + $0x170] sm:$0xff]
      %v963 = vld [vmem:[#allocation7 + $0x178] sm:$0xff]
      %v964 = vld [vmem:[#allocation7 + $0x180] sm:$0xff]
      %v965 = vld [vmem:[#allocation7 + $0x188] sm:$0xff]
      %v966 = vld [vmem:[#allocation7 + $0x190] sm:$0xff]
      %v967 = vld [vmem:[#allocation7 + $0x198] sm:$0xff]
      %v968 = vld [vmem:[#allocation7 + $0x1a0] sm:$0xff]
      %v969 = vld [vmem:[#allocation7 + $0x1a8] sm:$0xff]
      %v970 = vld [vmem:[#allocation7 + $0x1b0] sm:$0xff]
      %v971 = vld [vmem:[#allocation7 + $0x1b8] sm:$0xff]
      %v972 = vld [vmem:[#allocation7 + $0x1c0] sm:$0xff]
      %v973 = vld [vmem:[#allocation7 + $0x1c8] sm:$0xff]
      %v974 = vld [vmem:[#allocation7 + $0x1d0] sm:$0xff]
      %v975 = vld [vmem:[#allocation7 + $0x1d8] sm:$0xff]
      %v976 = vld [vmem:[#allocation7 + $0x1e0] sm:$0xff]
      %v977 = vld [vmem:[#allocation7 + $0x1e8] sm:$0xff]
      %v978 = vld [vmem:[#allocation7 + $0x1f0] sm:$0xff]
      %v979 = vld [vmem:[#allocation7 + $0x1f8] sm:$0xff]
      %v980 = vadd.f32 %v916, %v917
      %v981 = vadd.f32 %v980, %v918
      %v982 = vadd.f32 %v981, %v919
      %v983 = vadd.f32 %v982, %v920
      %v984 = vadd.f32 %v983, %v921
      %v985 = vadd.f32 %v984, %v922
      %v986 = vadd.f32 %v985, %v923
      %v987 = vadd.f32 %v986, %v924
      %v988 = vadd.f32 %v987, %v925
      %v989 = vadd.f32 %v988, %v926
      %v990 = vadd.f32 %v989, %v927
      %v991 = vadd.f32 %v990, %v928
      %v992 = vadd.f32 %v991, %v929
      %v993 = vadd.f32 %v992, %v930
      %v994 = vadd.f32 %v993, %v931
      %v995 = vadd.f32 %v994, %v932
      %v996 = vadd.f32 %v995, %v933
      %v997 = vadd.f32 %v996, %v934
      %v998 = vadd.f32 %v997, %v935
      %v999 = vadd.f32 %v998, %v936
      %v1000 = vadd.f32 %v999, %v937
      %v1001 = vadd.f32 %v1000, %v938
      %v1002 = vadd.f32 %v1001, %v939
      %v1003 = vadd.f32 %v1002, %v940
      %v1004 = vadd.f32 %v1003, %v941
      %v1005 = vadd.f32 %v1004, %v942
      %v1006 = vadd.f32 %v1005, %v943
      %v1007 = vadd.f32 %v1006, %v944
      %v1008 = vadd.f32 %v1007, %v945
      %v1009 = vadd.f32 %v1008, %v946
      %v1010 = vadd.f32 %v1009, %v947
      %v1011 = vadd.f32 %v1010, %v948
      %v1012 = vadd.f32 %v1011, %v949
      %v1013 = vadd.f32 %v1012, %v950
      %v1014 = vadd.f32 %v1013, %v951
      %v1015 = vadd.f32 %v1014, %v952
      %v1016 = vadd.f32 %v1015, %v953
      %v1017 = vadd.f32 %v1016, %v954
      %v1018 = vadd.f32 %v1017, %v955
      %v1019 = vadd.f32 %v1018, %v956
      %v1020 = vadd.f32 %v1019, %v957
      %v1021 = vadd.f32 %v1020, %v958
      %v1022 = vadd.f32 %v1021, %v959
      %v1023 = vadd.f32 %v1022, %v960
      %v1024 = vadd.f32 %v1023, %v961
      %v1025 = vadd.f32 %v1024, %v962
      %v1026 = vadd.f32 %v1025, %v963
      %v1027 = vadd.f32 %v1026, %v964
      %v1028 = vadd.f32 %v1027, %v965
      %v1029 = vadd.f32 %v1028, %v966
      %v1030 = vadd.f32 %v1029, %v967
      %v1031 = vadd.f32 %v1030, %v968
      %v1032 = vadd.f32 %v1031, %v969
      %v1033 = vadd.f32 %v1032, %v970
      %v1034 = vadd.f32 %v1033, %v971
      %v1035 = vadd.f32 %v1034, %v972
      %v1036 = vadd.f32 %v1035, %v973
      %v1037 = vadd.f32 %v1036, %v974
      %v1038 = vadd.f32 %v1037, %v975
      %v1039 = vadd.f32 %v1038, %v976
      %v1040 = vadd.f32 %v1039, %v977
      %v1041 = vadd.f32 %v1040, %v978
      %v1042 = vadd.f32 %v1041, %v979
      %v1043 = vrot.slane %v1042, 4
      %v1044 = vadd.f32 %v1042, %v1043
      %v1045 = vrot.slane %v1044, 2
      %v1046 = vadd.f32 %v1044, %v1045
      %v1047 = vrot.slane %v1046, 1
      %v1048 = vadd.f32 %v1046, %v1047
      %1049 = vst [vmem:[#allocation8] sm:$0x1] %v1048
      %v1050 = vmul.f32 %v916, %v916
      %v1051 = vmul.f32 %v917, %v917
      %v1052 = vmul.f32 %v918, %v918
      %v1053 = vmul.f32 %v919, %v919
      %v1054 = vmul.f32 %v920, %v920
      %v1055 = vmul.f32 %v921, %v921
      %v1056 = vmul.f32 %v922, %v922
      %v1057 = vmul.f32 %v923, %v923
      %v1058 = vmul.f32 %v924, %v924
      %v1059 = vmul.f32 %v925, %v925
      %v1060 = vmul.f32 %v926, %v926
      %v1061 = vmul.f32 %v927, %v927
      %v1062 = vmul.f32 %v928, %v928
      %v1063 = vmul.f32 %v929, %v929
      %v1064 = vmul.f32 %v930, %v930
      %v1065 = vmul.f32 %v931, %v931
      %v1066 = vmul.f32 %v932, %v932
      %v1067 = vmul.f32 %v933, %v933
      %v1068 = vmul.f32 %v934, %v934
      %v1069 = vmul.f32 %v935, %v935
      %v1070 = vmul.f32 %v936, %v936
      %v1071 = vmul.f32 %v937, %v937
      %v1072 = vmul.f32 %v938, %v938
      %v1073 = vmul.f32 %v939, %v939
      %v1074 = vmul.f32 %v940, %v940
      %v1075 = vmul.f32 %v941, %v941
      %v1076 = vmul.f32 %v942, %v942
      %v1077 = vmul.f32 %v943, %v943
      %v1078 = vmul.f32 %v944, %v944
      %v1079 = vmul.f32 %v945, %v945
      %v1080 = vmul.f32 %v946, %v946
      %v1081 = vmul.f32 %v947, %v947
      %v1082 = vmul.f32 %v948, %v948
      %v1083 = vmul.f32 %v949, %v949
      %v1084 = vmul.f32 %v950, %v950
      %v1085 = vmul.f32 %v951, %v951
      %v1086 = vmul.f32 %v952, %v952
      %v1087 = vmul.f32 %v953, %v953
      %v1088 = vmul.f32 %v954, %v954
      %v1089 = vmul.f32 %v955, %v955
      %v1090 = vmul.f32 %v956, %v956
      %v1091 = vmul.f32 %v957, %v957
      %v1092 = vmul.f32 %v958, %v958
      %v1093 = vmul.f32 %v959, %v959
      %v1094 = vmul.f32 %v960, %v960
      %v1095 = vmul.f32 %v961, %v961
      %v1096 = vmul.f32 %v962, %v962
      %v1097 = vmul.f32 %v963, %v963
      %v1098 = vmul.f32 %v964, %v964
      %v1099 = vmul.f32 %v965, %v965
      %v1100 = vmul.f32 %v966, %v966
      %v1101 = vmul.f32 %v967, %v967
      %v1102 = vmul.f32 %v968, %v968
      %v1103 = vmul.f32 %v969, %v969
      %v1104 = vmul.f32 %v970, %v970
      %v1105 = vmul.f32 %v971, %v971
      %v1106 = vmul.f32 %v972, %v972
      %v1107 = vmul.f32 %v973, %v973
      %v1108 = vmul.f32 %v974, %v974
      %v1109 = vmul.f32 %v975, %v975
      %v1110 = vmul.f32 %v976, %v976
      %v1111 = vmul.f32 %v977, %v977
      %v1112 = vmul.f32 %v978, %v978
      %v1113 = vmul.f32 %v979, %v979
      %v1114 = vadd.f32 %v1050, %v1051
      %v1115 = vadd.f32 %v1114, %v1052
      %v1116 = vadd.f32 %v1115, %v1053
      %v1117 = vadd.f32 %v1116, %v1054
      %v1118 = vadd.f32 %v1117, %v1055
      %v1119 = vadd.f32 %v1118, %v1056
      %v1120 = vadd.f32 %v1119, %v1057
      %v1121 = vadd.f32 %v1120, %v1058
      %v1122 = vadd.f32 %v1121, %v1059
      %v1123 = vadd.f32 %v1122, %v1060
      %v1124 = vadd.f32 %v1123, %v1061
      %v1125 = vadd.f32 %v1124, %v1062
      %v1126 = vadd.f32 %v1125, %v1063
      %v1127 = vadd.f32 %v1126, %v1064
      %v1128 = vadd.f32 %v1127, %v1065
      %v1129 = vadd.f32 %v1128, %v1066
      %v1130 = vadd.f32 %v1129, %v1067
      %v1131 = vadd.f32 %v1130, %v1068
      %v1132 = vadd.f32 %v1131, %v1069
      %v1133 = vadd.f32 %v1132, %v1070
      %v1134 = vadd.f32 %v1133, %v1071
      %v1135 = vadd.f32 %v1134, %v1072
      %v1136 = vadd.f32 %v1135, %v1073
      %v1137 = vadd.f32 %v1136, %v1074
      %v1138 = vadd.f32 %v1137, %v1075
      %v1139 = vadd.f32 %v1138, %v1076
      %v1140 = vadd.f32 %v1139, %v1077
      %v1141 = vadd.f32 %v1140, %v1078
      %v1142 = vadd.f32 %v1141, %v1079
      %v1143 = vadd.f32 %v1142, %v1080
      %v1144 = vadd.f32 %v1143, %v1081
      %v1145 = vadd.f32 %v1144, %v1082
      %v1146 = vadd.f32 %v1145, %v1083
      %v1147 = vadd.f32 %v1146, %v1084
      %v1148 = vadd.f32 %v1147, %v1085
      %v1149 = vadd.f32 %v1148, %v1086
      %v1150 = vadd.f32 %v1149, %v1087
      %v1151 = vadd.f32 %v1150, %v1088
      %v1152 = vadd.f32 %v1151, %v1089
      %v1153 = vadd.f32 %v1152, %v1090
      %v1154 = vadd.f32 %v1153, %v1091
      %v1155 = vadd.f32 %v1154, %v1092
      %v1156 = vadd.f32 %v1155, %v1093
      %v1157 = vadd.f32 %v1156, %v1094
      %v1158 = vadd.f32 %v1157, %v1095
      %v1159 = vadd.f32 %v1158, %v1096
      %v1160 = vadd.f32 %v1159, %v1097
      %v1161 = vadd.f32 %v1160, %v1098
      %v1162 = vadd.f32 %v1161, %v1099
      %v1163 = vadd.f32 %v1162, %v1100
      %v1164 = vadd.f32 %v1163, %v1101
      %v1165 = vadd.f32 %v1164, %v1102
      %v1166 = vadd.f32 %v1165, %v1103
      %v1167 = vadd.f32 %v1166, %v1104
      %v1168 = vadd.f32 %v1167, %v1105
      %v1169 = vadd.f32 %v1168, %v1106
      %v1170 = vadd.f32 %v1169, %v1107
      %v1171 = vadd.f32 %v1170, %v1108
      %v1172 = vadd.f32 %v1171, %v1109
      %v1173 = vadd.f32 %v1172, %v1110
      %v1174 = vadd.f32 %v1173, %v1111
      %v1175 = vadd.f32 %v1174, %v1112
      %v1176 = vadd.f32 %v1175, %v1113
      %v1177 = vrot.slane %v1176, 4
      %v1178 = vadd.f32 %v1176, %v1177
      %v1179 = vrot.slane %v1178, 2
      %v1180 = vadd.f32 %v1178, %v1179
      %v1181 = vrot.slane %v1180, 1
      %v1182 = vadd.f32 %v1180, %v1181
      %1183 = vst [vmem:[#allocation8 + $0x1] sm:$0x1] %v1182
    $region25: #{tpu_custom_call.1} parent=1 // pred_fallthru
      _
    // Predicated region
    $region26: #{tpu_custom_call.1} parent=1 // pred_check
      _
    $region27: #{tpu_custom_call.1} parent=1 // pred_check_branch
      %1185 = sbr.rel (0) target = $region29
    $region28: #{tpu_custom_call.1} parent=1 // pred_region
      %s1187 = ssub.s32 8192, 8192
      %1188 = vsyncadd [#allocation4], %s1187
      %s1189 = sshll.u32 [#allocation7], 4
      %s1190 = int_to_ptr.vmem [resolvable:$true] %s1189
      %1195 = dma.vmem_to_hbm [thread:$0]  %s1190, 8192, %s2, [#allocation4], 128, 128, 8
    $region29: #{tpu_custom_call.1} parent=1 // pred_fallthru
      _
    // Predicated region
    $region30: #{tpu_custom_call.1} parent=1 // pred_check
      _
    $region31: #{tpu_custom_call.1} parent=1 // pred_check_branch
      %1197 = sbr.rel (0) target = $region33
    $region32: #{tpu_custom_call.1} parent=1 // pred_region
      %s1199 = ssub.s32 32, 32
      %1200 = vsyncadd [#allocation9], %s1199
      %s1202 = sshll.u32 [#allocation8], 4
      %s1203 = int_to_ptr.vmem [resolvable:$true] %s1202
      %1205 = dma.vmem_to_hbm [thread:$0]  %s1203, 32, %s3, [#allocation9]
    $region33: #{tpu_custom_call.1} parent=1 // pred_fallthru
      _
    // Predicated region
    $region34: #{tpu_custom_call.1} parent=1 // pred_check
      _
    $region35: #{tpu_custom_call.1} parent=1 // pred_check_branch
      %1207 = sbr.rel (0) target = $region37
    $region36: #{tpu_custom_call.1} parent=1 // pred_region
      %1208 = dma.done [#allocation4], 8192
    $region37: #{tpu_custom_call.1} parent=1 // pred_fallthru
      _
    // Predicated region
    $region38: #{tpu_custom_call.1} parent=1 // pred_check
      _
    $region39: #{tpu_custom_call.1} parent=1 // pred_check_branch
      %1210 = sbr.rel (0) target = $region41
    $region40: #{tpu_custom_call.1} parent=1 // pred_region
      %1211 = dma.done [#allocation9], 32
    $region41: #{tpu_custom_call.1} parent=1 // pred_fallthru
      _
    %1212 = vsyncpa [#allocation3], 1
    %1213 = vsyncpa [#allocation6], 1
    %1214 = vsyncpa [#allocation4], 1
    %1215 = vsyncpa [#allocation9], 1

</llo_original>
